<compile_context>
chip_gen: v7x
topology: tpu7x:2x2x1
jax: 0.10.0
libtpu: 0.0.40
codegen_flags: <defaults>
</compile_context>

<pallas_src>
import functools
import math

import jax
import jax.numpy as jnp
from jax.experimental import pallas as pl
from jax.experimental.pallas import tpu as pltpu

EPS = 1e-08


# ----------------------------------------------------------------------------
# Kernels
# ----------------------------------------------------------------------------
def _epilogue(x_scaled_f32, g, out_dtype):
    """Final gamma * norm_x multiply. For sub-32-bit float outputs do the
    multiply/cast in the output dtype (bf16 VALU on v6e/v7x halves the epilogue
    vreg traffic); keep f32 math otherwise."""
    low_prec = (jnp.issubdtype(out_dtype, jnp.floating)
                and jnp.dtype(out_dtype).itemsize < 4)
    if low_prec:
        return g.astype(out_dtype) * x_scaled_f32.astype(out_dtype)
    return (g.astype(jnp.float32) * x_scaled_f32).astype(out_dtype)


def _rmsnorm_kernel(x_ref, g_ref, o_ref):
    # x_ref: (TILE_ROWS, D), g_ref: (1, D) resident, o_ref: (TILE_ROWS, D)
    x = x_ref[...].astype(jnp.float32)
    inv_d = jnp.float32(1.0 / x.shape[-1])
    # Two-pass centered variance (matches torch.var(unbiased=False); avoids
    # catastrophic cancellation). x is already VMEM-resident so the second pass
    # stays hidden under the block DMA on v5e/v6e.
    mean = jnp.sum(x, axis=-1, keepdims=True) * inv_d
    xc = x - mean
    var = jnp.sum(xc * xc, axis=-1, keepdims=True) * inv_d
    scale = jax.lax.rsqrt(var + jnp.float32(EPS))        # EUP rsqrt — free slot
    o_ref[...] = _epilogue(x * scale, g_ref[...], o_ref.dtype)


def _rmsnorm_packed_kernel(x_ref, g_ref, seg_ref, segt_ref, o_ref, *, d):
    # Lane-dense small-D path: k rows folded onto the lane axis, P = k*d.
    # x_ref: (TILE_ROWS, P), g_ref: (1, P) (gamma tiled k times),
    # seg_ref: (P, k) 0/1 segment-indicator, segt_ref: (k, P) its transpose.
    # Per-segment reductions/broadcasts go through the otherwise idle MXU.
    x = x_ref[...].astype(jnp.float32)
    seg = seg_ref[...]
    segt = segt_ref[...]
    inv_d = jnp.float32(1.0 / d)
    mean = jnp.dot(x, seg, preferred_element_type=jnp.float32) * inv_d        # (T, k)
    mean_b = jnp.dot(mean, segt, preferred_element_type=jnp.float32)          # (T, P)
    xc = x - mean_b
    var = jnp.dot(xc * xc, seg, preferred_element_type=jnp.float32) * inv_d   # (T, k)
    scale = jax.lax.rsqrt(var + jnp.float32(EPS))
    scale_b = jnp.dot(scale, segt, preferred_element_type=jnp.float32)        # (T, P)
    o_ref[...] = _epilogue(x * scale_b, g_ref[...], o_ref.dtype)


# ----------------------------------------------------------------------------
# Sizing helpers
# ----------------------------------------------------------------------------
def _vmem_capacity_bytes():
    try:
        return int(pltpu.get_tpu_info().vmem_capacity_bytes)
    except Exception:
        return 64 << 20   # conservative (v7x per-TC); safe everywhere


def _target_block_bytes(capacity_bytes, itemsize):
    # Budget ~half of VMEM across the pipeline: in+out I/O blocks double-buffered
    # (4x block) plus ~4 f32 working copies (4 * block * 4/itemsize).
    denom = 4.0 + 16.0 / max(1, itemsize)
    tgt = int(capacity_bytes * 0.5 / denom)
    return max(1 << 20, min(tgt, 8 << 20))


def _choose_tile_rows(n_rows, row_width, itemsize, target_block_bytes):
    tile = target_block_bytes // max(1, row_width * itemsize)
    tile = max(8, (int(tile) // 8) * 8)
    # Keep >= ~4 blocks when the problem allows it (shards across both v7x
    # TensorCores, gives pipeline depth) and never pick a tile far larger than
    # the problem itself.
    quarter = -(-n_rows // 4)                    # cdiv(n_rows, 4)
    quarter = max(8, ((quarter + 7) // 8) * 8)
    return min(tile, quarter)


# ----------------------------------------------------------------------------
# Wrapper
# ----------------------------------------------------------------------------
def rmsnorm(x, gamma, *, tile_rows=None):
    """x: (..., D), gamma: (D,). Returns gamma * x / sqrt(var(x, -1, ddof=0) + eps)."""
    orig_shape = x.shape
    D = orig_shape[-1]
    x2d = x.reshape(-1, D)
    N = x2d.shape[0]
    itemsize = jnp.dtype(x.dtype).itemsize

    capacity = _vmem_capacity_bytes()
    target_block_bytes = _target_block_bytes(capacity, itemsize)

    # Lane-dense packing: fold k rows onto lanes so the stored last dim is a
    # multiple of 128 (avoids masked vst.msk partial stores for small D).
    k = 128 // math.gcd(D, 128)
    use_packed = (k > 1) and (N % k == 0) and (k * D <= 2048)

    if use_packed:
        P = k * D
        rows = N // k
        row_width = P
        tr = tile_rows or _choose_tile_rows(rows, row_width, itemsize, target_block_bytes)

        lane_idx = jnp.arange(P)
        seg = (lane_idx[:, None] // D == jnp.arange(k)[None, :]).astype(jnp.float32)  # (P, k)
        segt = seg.T                                                                  # (k, P)
        g_in = jnp.tile(gamma, k).reshape(1, P)

        kernel = functools.partial(_rmsnorm_packed_kernel, d=D)
        in_specs = [
            pl.BlockSpec((tr, P), lambda i: (i, 0)),
            pl.BlockSpec((1, P), lambda i: (0, 0)),
            pl.BlockSpec((P, k), lambda i: (0, 0)),
            pl.BlockSpec((k, P), lambda i: (0, 0)),
        ]
        args = (x2d.reshape(rows, P), g_in, seg, segt)
        resident_bytes = P * g_in.dtype.itemsize + 2 * P * k * 4
    else:
        rows = N
        row_width = D
        tr = tile_rows or _choose_tile_rows(rows, row_width, itemsize, target_block_bytes)

        kernel = _rmsnorm_kernel
        in_specs = [
            pl.BlockSpec((tr, D), lambda i: (i, 0)),
            pl.BlockSpec((1, D), lambda i: (0, 0)),
        ]
        args = (x2d, gamma.reshape(1, D))
        resident_bytes = D * jnp.dtype(gamma.dtype).itemsize

    grid = pl.cdiv(rows, tr)   # ragged last block handled by Pallas masking

    # Explicit VMEM budget with headroom (<= 75% of per-core VMEM; matters on v7x).
    block_bytes = tr * row_width * itemsize
    vmem_est = 2 * 2 * block_bytes          # in + out blocks, double-buffered
    vmem_est += 4 * tr * row_width * 4      # f32 working copies inside the kernel
    vmem_est += 2 * resident_bytes          # resident gamma / segment matrices
    vmem_limit = int(vmem_est * 1.25) + (1 << 20)
    vmem_limit = min(max(vmem_limit, 16 << 20), int(capacity * 0.75))

    out = pl.pallas_call(
        kernel,
        out_shape=jax.ShapeDtypeStruct((rows, row_width), x.dtype),
        grid_spec=pltpu.PrefetchScalarGridSpec(
            num_scalar_prefetch=0,
            grid=(grid,),
            in_specs=in_specs,
            out_specs=pl.BlockSpec((tr, row_width), lambda i: (i, 0)),
        ),
        compiler_params=pltpu.CompilerParams(
            dimension_semantics=("parallel",),
            vmem_limit_bytes=vmem_limit,
        ),
    )(*args)

    return out.reshape(orig_shape)


# ----------------------------------------------------------------------------
# Reference + demo
# ----------------------------------------------------------------------------
def rmsnorm_ref(x, gamma):
    x32 = x.astype(jnp.float32)
    var = jnp.var(x32, axis=-1, keepdims=True)   # ddof=0 == torch unbiased=False
    return (gamma.astype(jnp.float32) * (x32 / jnp.sqrt(var + EPS))).astype(x.dtype)


if __name__ == "__main__":
    key = jax.random.PRNGKey(0)

    # Shapes consistent with the module's forward: (batch, seq, emb_dim).
    batch, seq, emb_dim = 2, 8, 32
    x = jax.random.normal(key, (batch, seq, emb_dim), dtype=jnp.float32)
    gamma = jnp.ones((emb_dim,), dtype=jnp.float32)   # nn.Parameter(torch.ones(emb_dim))

    out = jax.block_until_ready(rmsnorm(x, gamma))           # packed lane-dense path
    assert out.shape == x.shape
    assert jnp.allclose(out, rmsnorm_ref(x, gamma), atol=1e-5, rtol=1e-5), "mismatch (packed)"

    # Row count not divisible by the packing factor -> streaming fallback path
    # with a ragged (masked) last block.
    x2 = jax.random.normal(jax.random.PRNGKey(1), (3, 5, emb_dim), dtype=jnp.float32)
    out2 = jax.block_until_ready(rmsnorm(x2, gamma))
    assert jnp.allclose(out2, rmsnorm_ref(x2, gamma), atol=1e-5, rtol=1e-5), "mismatch (ragged)"

    # Lane-dense standard path (D % 128 == 0).
    d3 = 128
    g3 = jnp.ones((d3,), dtype=jnp.float32)
    x3 = jax.random.normal(jax.random.PRNGKey(2), (2, 8, d3), dtype=jnp.float32)
    out3 = jax.block_until_ready(rmsnorm(x3, g3))
    assert jnp.allclose(out3, rmsnorm_ref(x3, g3), atol=1e-5, rtol=1e-5), "mismatch (D=128)"

    # bf16 I/O exercises the low-precision epilogue.
    x4 = x3.astype(jnp.bfloat16)
    g4 = g3.astype(jnp.bfloat16)
    out4 = jax.block_until_ready(rmsnorm(x4, g4))
    ref4 = rmsnorm_ref(x4, g4)
    assert out4.dtype == jnp.bfloat16
    assert jnp.allclose(out4.astype(jnp.float32), ref4.astype(jnp.float32),
                        atol=3e-2, rtol=3e-2), "mismatch (bf16)"

    print("KERNEL_OK")
</pallas_src>

<mosaic_0001>
module attributes {stable_mosaic.version = 11 : i64} {
  func.func @_rmsnorm_packed_kernel(%arg0: i32, %arg1: memref<8x128xf32, #tpu.memory_space<vmem>>, %arg2: memref<1x128xf32, #tpu.memory_space<vmem>>, %arg3: memref<128x4xf32, #tpu.memory_space<vmem>>, %arg4: memref<4x128xf32, #tpu.memory_space<vmem>>, %arg5: memref<8x128xf32, #tpu.memory_space<vmem>>) attributes {dimension_semantics = [#tpu.dimension_semantics<parallel>], iteration_bounds = array<i64: 1>, scalar_prefetch = 0 : i64, scratch_operands = 0 : i64, tpu.core_type = #tpu.core_type<tc>, window_params = [{transform_indices = @transform_0, window_bounds = array<i64: 8, 128>}, {pipeline_mode = #tpu.pipeline_mode<synchronous>, transform_indices = @transform_1, window_bounds = array<i64: 1, 128>}, {pipeline_mode = #tpu.pipeline_mode<synchronous>, transform_indices = @transform_2, window_bounds = array<i64: 128, 4>}, {pipeline_mode = #tpu.pipeline_mode<synchronous>, transform_indices = @transform_3, window_bounds = array<i64: 4, 128>}, {transform_indices = @transform_4, window_bounds = array<i64: 8, 128>}]} {
    %c0 = arith.constant 0 : index
    %c0_0 = arith.constant 0 : index
    %0 = vector.load %arg1[%c0, %c0_0] : memref<8x128xf32, #tpu.memory_space<vmem>>, vector<8x128xf32>
    %c0_1 = arith.constant 0 : index
    %c0_2 = arith.constant 0 : index
    %1 = vector.load %arg3[%c0_1, %c0_2] : memref<128x4xf32, #tpu.memory_space<vmem>>, vector<128x4xf32>
    %c0_3 = arith.constant 0 : index
    %c0_4 = arith.constant 0 : index
    %2 = vector.load %arg4[%c0_3, %c0_4] : memref<4x128xf32, #tpu.memory_space<vmem>>, vector<4x128xf32>
    %cst = arith.constant dense<0.000000e+00> : vector<8x4xf32>
    %3 = tpu.matmul %0, %1, %cst {dimension_numbers = #tpu.dot_dimension_numbers<[1], [0], [0], [1], [0, 0, 1, 1], [], []>} : vector<8x128xf32>, vector<128x4xf32>, vector<8x4xf32> -> vector<8x4xf32>
    %cst_5 = arith.constant 3.125000e-02 : f32
    %4 = vector.broadcast %cst_5 : f32 to vector<8x4xf32>
    %5 = arith.mulf %3, %4 : vector<8x4xf32>
    %cst_6 = arith.constant dense<0.000000e+00> : vector<8x128xf32>
    %6 = tpu.matmul %5, %2, %cst_6 {dimension_numbers = #tpu.dot_dimension_numbers<[1], [0], [0], [1], [0, 0, 1, 1], [], []>} : vector<8x4xf32>, vector<4x128xf32>, vector<8x128xf32> -> vector<8x128xf32>
    %7 = arith.subf %0, %6 : vector<8x128xf32>
    %8 = arith.mulf %7, %7 : vector<8x128xf32>
    %cst_7 = arith.constant dense<0.000000e+00> : vector<8x4xf32>
    %9 = tpu.matmul %8, %1, %cst_7 {dimension_numbers = #tpu.dot_dimension_numbers<[1], [0], [0], [1], [0, 0, 1, 1], [], []>} : vector<8x128xf32>, vector<128x4xf32>, vector<8x4xf32> -> vector<8x4xf32>
    %cst_8 = arith.constant 3.125000e-02 : f32
    %10 = vector.broadcast %cst_8 : f32 to vector<8x4xf32>
    %11 = arith.mulf %9, %10 : vector<8x4xf32>
    %cst_9 = arith.constant 9.99999993E-9 : f32
    %12 = vector.broadcast %cst_9 : f32 to vector<8x4xf32>
    %13 = arith.addf %11, %12 : vector<8x4xf32>
    %14 = math.rsqrt %13 : vector<8x4xf32>
    %cst_10 = arith.constant dense<0.000000e+00> : vector<8x128xf32>
    %15 = tpu.matmul %14, %2, %cst_10 {dimension_numbers = #tpu.dot_dimension_numbers<[1], [0], [0], [1], [0, 0, 1, 1], [], []>} : vector<8x4xf32>, vector<4x128xf32>, vector<8x128xf32> -> vector<8x128xf32>
    %16 = arith.mulf %0, %15 : vector<8x128xf32>
    %c0_11 = arith.constant 0 : index
    %c0_12 = arith.constant 0 : index
    %17 = vector.load %arg2[%c0_11, %c0_12] : memref<1x128xf32, #tpu.memory_space<vmem>>, vector<1x128xf32>
    %18 = vector.broadcast %17 : vector<1x128xf32> to vector<8x128xf32>
    %19 = arith.mulf %18, %16 : vector<8x128xf32>
    %c0_13 = arith.constant 0 : index
    %c0_14 = arith.constant 0 : index
    %20 = vector.load %arg5[%c0_13, %c0_14] : memref<8x128xf32, #tpu.memory_space<vmem>>, vector<8x128xf32>
    tpu.vector_store %arg5[%c0_13, %c0_14], %19 {strides = array<i32>} : memref<8x128xf32, #tpu.memory_space<vmem>>, vector<8x128xf32>,
    return
  }
  func.func @transform_0(%arg0: i32) -> (i32, i32) {
    %c0_i32 = arith.constant 0 : i32
    %c0_i32_0 = arith.constant 0 : i32
    return %arg0, %c0_i32 : i32, i32
  }
  func.func @transform_1(%arg0: i32) -> (i32, i32) {
    %c0_i32 = arith.constant 0 : i32
    %c0_i32_0 = arith.constant 0 : i32
    %c0_i32_1 = arith.constant 0 : i32
    return %c0_i32, %c0_i32_0 : i32, i32
  }
  func.func @transform_2(%arg0: i32) -> (i32, i32) {
    %c0_i32 = arith.constant 0 : i32
    %c0_i32_0 = arith.constant 0 : i32
    %c0_i32_1 = arith.constant 0 : i32
    return %c0_i32, %c0_i32_0 : i32, i32
  }
  func.func @transform_3(%arg0: i32) -> (i32, i32) {
    %c0_i32 = arith.constant 0 : i32
    %c0_i32_0 = arith.constant 0 : i32
    %c0_i32_1 = arith.constant 0 : i32
    return %c0_i32, %c0_i32_0 : i32, i32
  }
  func.func @transform_4(%arg0: i32) -> (i32, i32) {
    %c0_i32 = arith.constant 0 : i32
    %c0_i32_0 = arith.constant 0 : i32
    return %arg0, %c0_i32 : i32, i32
  }
}

</mosaic_0001>

<llo_original>
// kernel: tpu_custom_call.1
$region0: #{tpu_custom_call.1}
  #allocation0 [shape = 'u32[]', space=smem, size = 0x4, offset = 0x4, fixed_abs, tag = 'smem constant byte address 0x4 - core index']
  #allocation1 [shape = 'u32[144,128]{1,0:T(1,128)}', space=vmem, size = 0x12000, scoped, tag = 'internal scratch']
  %s0 = inlined_call_operand.vmem [shape: f32[4,128], index: 0, kind: input, shape index: {}]
  %s1 = inlined_call_operand.vmem [shape: f32[1,128], index: 1, kind: input, shape index: {}]
  %s2 = inlined_call_operand.vmem [shape: f32[128,4], index: 2, kind: input, shape index: {}]
  %s3 = inlined_call_operand.vmem [shape: f32[4,128], index: 3, kind: input, shape index: {}]
  %s4 = inlined_call_operand.hbm [shape: f32[4,128], index: 4, kind: output, shape index: {}]
  %s5 = sld [smem:[#allocation0]]
  $region26: #{tpu_custom_call.1} parent=0
    _
  %s7 = ssub.s32 1, %s5
  %s8 = scalar_select 0, %s7, %s5
  $region1: #{tpu_custom_call.1} parent=0
    #allocation2 [shape = 'u8[4096]{0}', space=vmem, size = 0x1000, scoped, tag = 'output window, operand 0, single buffered']
    #allocation3 [shape = 's32[1]{0}', space=sflag, size = 0x4, scoped, tag = 'scoped memory for tpu_custom_call.1']
    %9 = vsyncpa [#allocation3], 0
    // Predicated region
    $region2: #{tpu_custom_call.1} parent=1 // pred_check
      _
    $region3: #{tpu_custom_call.1} parent=1 // pred_check_branch
      %11 = sbr.rel (0) target = $region5
    $region4: #{tpu_custom_call.1} parent=1 // pred_region
      _
    $region5: #{tpu_custom_call.1} parent=1 // pred_fallthru
      _
    // Predicated region
    $region6: #{tpu_custom_call.1} parent=1 // pred_check
      _
    $region7: #{tpu_custom_call.1} parent=1 // pred_check_branch
      %13 = sbr.rel (0) target = $region9
    $region8: #{tpu_custom_call.1} parent=1 // pred_region
      _
    $region9: #{tpu_custom_call.1} parent=1 // pred_fallthru
      _
    // Predicated region
    $region10: #{tpu_custom_call.1} parent=1 // pred_check
      _
    $region11: #{tpu_custom_call.1} parent=1 // pred_check_branch
      %15 = sbr.rel (0) target = $region13
    $region12: #{tpu_custom_call.1} parent=1 // pred_region
      _
    $region13: #{tpu_custom_call.1} parent=1 // pred_fallthru
      _
    // Predicated region
    $region14: #{tpu_custom_call.1} parent=1 // pred_check
      _
    $region15: #{tpu_custom_call.1} parent=1 // pred_check_branch
      %17 = sbr.rel (0) target = $region17
    $region16: #{tpu_custom_call.1} parent=1 // pred_region
      _
    $region17: #{tpu_custom_call.1} parent=1 // pred_fallthru
      _
    %v18 = vld [vmem:[%s0] sm:$0xff]
    %v19 = vld [vmem:[%s2] sm:$0xff]
    %v20 = vld [vmem:[%s2 + $0x8] sm:$0xff]
    %v21 = vld [vmem:[%s2 + $0x10] sm:$0xff]
    %v22 = vld [vmem:[%s2 + $0x18] sm:$0xff]
    %v23 = vld [vmem:[%s2 + $0x20] sm:$0xff]
    %v24 = vld [vmem:[%s2 + $0x28] sm:$0xff]
    %v25 = vld [vmem:[%s2 + $0x30] sm:$0xff]
    %v26 = vld [vmem:[%s2 + $0x38] sm:$0xff]
    %v27 = vld [vmem:[%s2 + $0x40] sm:$0xff]
    %v28 = vld [vmem:[%s2 + $0x48] sm:$0xff]
    %v29 = vld [vmem:[%s2 + $0x50] sm:$0xff]
    %v30 = vld [vmem:[%s2 + $0x58] sm:$0xff]
    %v31 = vld [vmem:[%s2 + $0x60] sm:$0xff]
    %v32 = vld [vmem:[%s2 + $0x68] sm:$0xff]
    %v33 = vld [vmem:[%s2 + $0x70] sm:$0xff]
    %v34 = vld [vmem:[%s2 + $0x78] sm:$0xff]
    %v35 = vld [vmem:[%s3] sm:$0xf]
    %36 = vmatprep.subr.mxu0 0.0
    %37 = vmatpush1.msra.mxu0 %v19
    %38 = vmatprep.subr.mxu0 0.0
    %39 = vmatpush1.msra.mxu0 %v20
    %40 = vmatprep.subr.mxu0 0.0
    %41 = vmatpush1.msra.mxu0 %v21
    %42 = vmatprep.subr.mxu0 0.0
    %43 = vmatpush1.msra.mxu0 %v22
    %44 = vmatprep.subr.mxu0 0.0
    %45 = vmatpush1.msra.mxu0 %v23
    %46 = vmatprep.subr.mxu0 0.0
    %47 = vmatpush1.msra.mxu0 %v24
    %48 = vmatprep.subr.mxu0 0.0
    %49 = vmatpush1.msra.mxu0 %v25
    %50 = vmatprep.subr.mxu0 0.0
    %51 = vmatpush1.msra.mxu0 %v26
    %52 = vmatprep.subr.mxu0 0.0
    %53 = vmatpush1.msra.mxu0 %v27
    %54 = vmatprep.subr.mxu0 0.0
    %55 = vmatpush1.msra.mxu0 %v28
    %56 = vmatprep.subr.mxu0 0.0
    %57 = vmatpush1.msra.mxu0 %v29
    %58 = vmatprep.subr.mxu0 0.0
    %59 = vmatpush1.msra.mxu0 %v30
    %60 = vmatprep.subr.mxu0 0.0
    %61 = vmatpush1.msra.mxu0 %v31
    %62 = vmatprep.subr.mxu0 0.0
    %63 = vmatpush1.msra.mxu0 %v32
    %64 = vmatprep.subr.mxu0 0.0
    %65 = vmatpush1.msra.mxu0 %v33
    %66 = vmatprep.subr.mxu0 0.0
    %67 = vmatpush1.msra.mxu0 %v34
    %68 = vmatprep.subr.mxu0 0.0
    %69 = vmatpush1.msra.mxu0 0.0
    %70 = vmatprep.subr.mxu0 0.0
    %71 = vmatpush1.msra.mxu0 0.0
    %72 = vmatprep.subr.mxu0 0.0
    %73 = vmatpush1.msra.mxu0 0.0
    %74 = vmatprep.subr.mxu0 0.0
    %75 = vmatpush1.msra.mxu0 0.0
    %76 = vmatprep.subr.mxu0 0.0
    %77 = vmatpush1.msra.mxu0 0.0
    %78 = vmatprep.subr.mxu0 0.0
    %79 = vmatpush1.msra.mxu0 0.0
    %80 = vmatprep.subr.mxu0 0.0
    %81 = vmatpush1.msra.mxu0 0.0
    %82 = vmatprep.subr.mxu0 0.0
    %83 = vmatpush1.msra.mxu0 0.0
    %84 = vmatprep.subr.mxu0 0.0
    %85 = vmatpush1.msra.mxu0 0.0
    %86 = vmatprep.subr.mxu0 0.0
    %87 = vmatpush1.msra.mxu0 0.0
    %88 = vmatprep.subr.mxu0 0.0
    %89 = vmatpush1.msra.mxu0 0.0
    %90 = vmatprep.subr.mxu0 0.0
    %91 = vmatpush1.msra.mxu0 0.0
    %92 = vmatprep.subr.mxu0 0.0
    %93 = vmatpush1.msra.mxu0 0.0
    %94 = vmatprep.subr.mxu0 0.0
    %95 = vmatpush1.msra.mxu0 0.0
    %96 = vmatprep.subr.mxu0 0.0
    %97 = vmatpush1.msra.mxu0 0.0
    %98 = vmatprep.subr.mxu0 0.0
    %99 = vmatpush1.msra.mxu0 0.0
    %100 = vmatprep.mubr.f32.mxu0 0.0
    %101 = vmatmul.mubr.f32.gmra.mrb[0].mxu0 %v18
    %v102 = vpop.f32.mrb[0].mxu0
    %v103 = vadd.f32 0.0, %v102
    %v104 = vpop.f32.mrb[0].mxu0
    %105 = vdwg.mxu0
    %v106 = vmul.f32 %v103, 0.03125
    %vm107 = vcmask 31744
    %v109 = vsel %vm107, %v106, 0
    %vm111 = vcmask 1043456
    %v113 = vsel %vm111, %v35, 0
    %115 = vmatprep.subr.mxu0 0.0
    %116 = vmatpush1.msra.mxu0 %v113
    %117 = vmatprep.subr.mxu0 0.0
    %118 = vmatpush1.msra.mxu0 0.0
    %119 = vmatprep.subr.mxu0 0.0
    %120 = vmatpush1.msra.mxu0 0.0
    %121 = vmatprep.subr.mxu0 0.0
    %122 = vmatpush1.msra.mxu0 0.0
    %123 = vmatprep.subr.mxu0 0.0
    %124 = vmatpush1.msra.mxu0 0.0
    %125 = vmatprep.subr.mxu0 0.0
    %126 = vmatpush1.msra.mxu0 0.0
    %127 = vmatprep.subr.mxu0 0.0
    %128 = vmatpush1.msra.mxu0 0.0
    %129 = vmatprep.subr.mxu0 0.0
    %130 = vmatpush1.msra.mxu0 0.0
    %131 = vmatprep.subr.mxu0 0.0
    %132 = vmatpush1.msra.mxu0 0.0
    %133 = vmatprep.subr.mxu0 0.0
    %134 = vmatpush1.msra.mxu0 0.0
    %135 = vmatprep.subr.mxu0 0.0
    %136 = vmatpush1.msra.mxu0 0.0
    %137 = vmatprep.subr.mxu0 0.0
    %138 = vmatpush1.msra.mxu0 0.0
    %139 = vmatprep.subr.mxu0 0.0
    %140 = vmatpush1.msra.mxu0 0.0
    %141 = vmatprep.subr.mxu0 0.0
    %142 = vmatpush1.msra.mxu0 0.0
    %143 = vmatprep.subr.mxu0 0.0
    %144 = vmatpush1.msra.mxu0 0.0
    %145 = vmatprep.subr.mxu0 0.0
    %146 = vmatpush1.msra.mxu0 0.0
    %147 = vmatprep.subr.mxu0 0.0
    %148 = vmatpush1.msra.mxu0 0.0
    %149 = vmatprep.subr.mxu0 0.0
    %150 = vmatpush1.msra.mxu0 0.0
    %151 = vmatprep.subr.mxu0 0.0
    %152 = vmatpush1.msra.mxu0 0.0
    %153 = vmatprep.subr.mxu0 0.0
    %154 = vmatpush1.msra.mxu0 0.0
    %155 = vmatprep.subr.mxu0 0.0
    %156 = vmatpush1.msra.mxu0 0.0
    %157 = vmatprep.subr.mxu0 0.0
    %158 = vmatpush1.msra.mxu0 0.0
    %159 = vmatprep.subr.mxu0 0.0
    %160 = vmatpush1.msra.mxu0 0.0
    %161 = vmatprep.subr.mxu0 0.0
    %162 = vmatpush1.msra.mxu0 0.0
    %163 = vmatprep.subr.mxu0 0.0
    %164 = vmatpush1.msra.mxu0 0.0
    %165 = vmatprep.subr.mxu0 0.0
    %166 = vmatpush1.msra.mxu0 0.0
    %167 = vmatprep.subr.mxu0 0.0
    %168 = vmatpush1.msra.mxu0 0.0
    %169 = vmatprep.subr.mxu0 0.0
    %170 = vmatpush1.msra.mxu0 0.0
    %171 = vmatprep.subr.mxu0 0.0
    %172 = vmatpush1.msra.mxu0 0.0
    %173 = vmatprep.subr.mxu0 0.0
    %174 = vmatpush1.msra.mxu0 0.0
    %175 = vmatprep.subr.mxu0 0.0
    %176 = vmatpush1.msra.mxu0 0.0
    %177 = vmatprep.subr.mxu0 0.0
    %178 = vmatpush1.msra.mxu0 0.0
    %179 = vmatprep.mubr.f32.mxu0 0.0
    %180 = vmatmul.mubr.f32.gmra.mrb[0].mxu0 %v109
    %v181 = vpop.f32.mrb[0].mxu0
    %v182 = vadd.f32 0.0, %v181
    %v183 = vpop.f32.mrb[0].mxu0
    %184 = vdwg.mxu0
    %v185 = vsub.f32 %v18, %v182
    %v186 = vmul.f32 %v185, %v185
    %187 = vmatprep.subr.mxu0 0.0
    %188 = vmatpush1.msra.mxu0 %v19
    %189 = vmatprep.subr.mxu0 0.0
    %190 = vmatpush1.msra.mxu0 %v20
    %191 = vmatprep.subr.mxu0 0.0
    %192 = vmatpush1.msra.mxu0 %v21
    %193 = vmatprep.subr.mxu0 0.0
    %194 = vmatpush1.msra.mxu0 %v22
    %195 = vmatprep.subr.mxu0 0.0
    %196 = vmatpush1.msra.mxu0 %v23
    %197 = vmatprep.subr.mxu0 0.0
    %198 = vmatpush1.msra.mxu0 %v24
    %199 = vmatprep.subr.mxu0 0.0
    %200 = vmatpush1.msra.mxu0 %v25
    %201 = vmatprep.subr.mxu0 0.0
    %202 = vmatpush1.msra.mxu0 %v26
    %203 = vmatprep.subr.mxu0 0.0
    %204 = vmatpush1.msra.mxu0 %v27
    %205 = vmatprep.subr.mxu0 0.0
    %206 = vmatpush1.msra.mxu0 %v28
    %207 = vmatprep.subr.mxu0 0.0
    %208 = vmatpush1.msra.mxu0 %v29
    %209 = vmatprep.subr.mxu0 0.0
    %210 = vmatpush1.msra.mxu0 %v30
    %211 = vmatprep.subr.mxu0 0.0
    %212 = vmatpush1.msra.mxu0 %v31
    %213 = vmatprep.subr.mxu0 0.0
    %214 = vmatpush1.msra.mxu0 %v32
    %215 = vmatprep.subr.mxu0 0.0
    %216 = vmatpush1.msra.mxu0 %v33
    %217 = vmatprep.subr.mxu0 0.0
    %218 = vmatpush1.msra.mxu0 %v34
    %219 = vmatprep.subr.mxu0 0.0
    %220 = vmatpush1.msra.mxu0 0.0
    %221 = vmatprep.subr.mxu0 0.0
    %222 = vmatpush1.msra.mxu0 0.0
    %223 = vmatprep.subr.mxu0 0.0
    %224 = vmatpush1.msra.mxu0 0.0
    %225 = vmatprep.subr.mxu0 0.0
    %226 = vmatpush1.msra.mxu0 0.0
    %227 = vmatprep.subr.mxu0 0.0
    %228 = vmatpush1.msra.mxu0 0.0
    %229 = vmatprep.subr.mxu0 0.0
    %230 = vmatpush1.msra.mxu0 0.0
    %231 = vmatprep.subr.mxu0 0.0
    %232 = vmatpush1.msra.mxu0 0.0
    %233 = vmatprep.subr.mxu0 0.0
    %234 = vmatpush1.msra.mxu0 0.0
    %235 = vmatprep.subr.mxu0 0.0
    %236 = vmatpush1.msra.mxu0 0.0
    %237 = vmatprep.subr.mxu0 0.0
    %238 = vmatpush1.msra.mxu0 0.0
    %239 = vmatprep.subr.mxu0 0.0
    %240 = vmatpush1.msra.mxu0 0.0
    %241 = vmatprep.subr.mxu0 0.0
    %242 = vmatpush1.msra.mxu0 0.0
    %243 = vmatprep.subr.mxu0 0.0
    %244 = vmatpush1.msra.mxu0 0.0
    %245 = vmatprep.subr.mxu0 0.0
    %246 = vmatpush1.msra.mxu0 0.0
    %247 = vmatprep.subr.mxu0 0.0
    %248 = vmatpush1.msra.mxu0 0.0
    %249 = vmatprep.subr.mxu0 0.0
    %250 = vmatpush1.msra.mxu0 0.0
    %251 = vmatprep.mubr.f32.mxu0 0.0
    %252 = vmatmul.mubr.f32.gmra.mrb[0].mxu0 %v186
    %v253 = vpop.f32.mrb[0].mxu0
    %v254 = vadd.f32 0.0, %v253
    %v255 = vpop.f32.mrb[0].mxu0
    %256 = vdwg.mxu0
    %v257 = vmul.f32 %v254, 0.03125
    %v258 = vadd.f32 %v257, 1e-08
    %v259 = vrsqrt.pop %v258
    %v261 = vsel %vm107, %v259, 0
    %263 = vmatprep.subr.mxu0 0.0
    %264 = vmatpush1.msra.mxu0 %v113
    %265 = vmatprep.subr.mxu0 0.0
    %266 = vmatpush1.msra.mxu0 0.0
    %267 = vmatprep.subr.mxu0 0.0
    %268 = vmatpush1.msra.mxu0 0.0
    %269 = vmatprep.subr.mxu0 0.0
    %270 = vmatpush1.msra.mxu0 0.0
    %271 = vmatprep.subr.mxu0 0.0
    %272 = vmatpush1.msra.mxu0 0.0
    %273 = vmatprep.subr.mxu0 0.0
    %274 = vmatpush1.msra.mxu0 0.0
    %275 = vmatprep.subr.mxu0 0.0
    %276 = vmatpush1.msra.mxu0 0.0
    %277 = vmatprep.subr.mxu0 0.0
    %278 = vmatpush1.msra.mxu0 0.0
    %279 = vmatprep.subr.mxu0 0.0
    %280 = vmatpush1.msra.mxu0 0.0
    %281 = vmatprep.subr.mxu0 0.0
    %282 = vmatpush1.msra.mxu0 0.0
    %283 = vmatprep.subr.mxu0 0.0
    %284 = vmatpush1.msra.mxu0 0.0
    %285 = vmatprep.subr.mxu0 0.0
    %286 = vmatpush1.msra.mxu0 0.0
    %287 = vmatprep.subr.mxu0 0.0
    %288 = vmatpush1.msra.mxu0 0.0
    %289 = vmatprep.subr.mxu0 0.0
    %290 = vmatpush1.msra.mxu0 0.0
    %291 = vmatprep.subr.mxu0 0.0
    %292 = vmatpush1.msra.mxu0 0.0
    %293 = vmatprep.subr.mxu0 0.0
    %294 = vmatpush1.msra.mxu0 0.0
    %295 = vmatprep.subr.mxu0 0.0
    %296 = vmatpush1.msra.mxu0 0.0
    %297 = vmatprep.subr.mxu0 0.0
    %298 = vmatpush1.msra.mxu0 0.0
    %299 = vmatprep.subr.mxu0 0.0
    %300 = vmatpush1.msra.mxu0 0.0
    %301 = vmatprep.subr.mxu0 0.0
    %302 = vmatpush1.msra.mxu0 0.0
    %303 = vmatprep.subr.mxu0 0.0
    %304 = vmatpush1.msra.mxu0 0.0
    %305 = vmatprep.subr.mxu0 0.0
    %306 = vmatpush1.msra.mxu0 0.0
    %307 = vmatprep.subr.mxu0 0.0
    %308 = vmatpush1.msra.mxu0 0.0
    %309 = vmatprep.subr.mxu0 0.0
    %310 = vmatpush1.msra.mxu0 0.0
    %311 = vmatprep.subr.mxu0 0.0
    %312 = vmatpush1.msra.mxu0 0.0
    %313 = vmatprep.subr.mxu0 0.0
    %314 = vmatpush1.msra.mxu0 0.0
    %315 = vmatprep.subr.mxu0 0.0
    %316 = vmatpush1.msra.mxu0 0.0
    %317 = vmatprep.subr.mxu0 0.0
    %318 = vmatpush1.msra.mxu0 0.0
    %319 = vmatprep.subr.mxu0 0.0
    %320 = vmatpush1.msra.mxu0 0.0
    %321 = vmatprep.subr.mxu0 0.0
    %322 = vmatpush1.msra.mxu0 0.0
    %323 = vmatprep.subr.mxu0 0.0
    %324 = vmatpush1.msra.mxu0 0.0
    %325 = vmatprep.subr.mxu0 0.0
    %326 = vmatpush1.msra.mxu0 0.0
    %327 = vmatprep.mubr.f32.mxu0 0.0
    %328 = vmatmul.mubr.f32.gmra.mrb[0].mxu0 %v261
    %v329 = vpop.f32.mrb[0].mxu0
    %v330 = vadd.f32 0.0, %v329
    %v331 = vpop.f32.mrb[0].mxu0
    %332 = vdwg.mxu0
    %v333 = vmul.f32 %v18, %v330
    %v334 = vld [vmem:[%s1] sm:$0x1]
    %v336 = vlaneseq
    %v337 = vshrl.u32 %v336, 7
    %v338 = vsub.s32 0, %v337
    %v339 = vrot.slane %v334, %v338
    %v341 = vmul.f32 %v339, %v333
    %342 = vst [vmem:[#allocation2] sm:$0xff] %v341
    // Predicated region
    $region18: #{tpu_custom_call.1} parent=1 // pred_check
      _
    $region19: #{tpu_custom_call.1} parent=1 // pred_check_branch
      %344 = sbr.rel (0) target = $region21
    $region20: #{tpu_custom_call.1} parent=1 // pred_region
      %s346 = ssub.s32 128, 64
      %347 = vsyncadd [#allocation3], %s346
      %s348 = sshll.u32 [#allocation2], 4
      %s349 = int_to_ptr.vmem [resolvable:$true] %s348
      %354 = dma.vmem_to_hbm [thread:$0]  %s349, 64, %s4, [#allocation3], 64, 64, 4
    $region21: #{tpu_custom_call.1} parent=1 // pred_fallthru
      _
    // Predicated region
    $region22: #{tpu_custom_call.1} parent=1 // pred_check
      _
    $region23: #{tpu_custom_call.1} parent=1 // pred_check_branch
      %356 = sbr.rel (0) target = $region25
    $region24: #{tpu_custom_call.1} parent=1 // pred_region
      %357 = dma.done [#allocation3], 128
    $region25: #{tpu_custom_call.1} parent=1 // pred_fallthru
      _
    %358 = vsyncpa [#allocation3], 1

</llo_original>
